<compile_context>
chip_gen: v5e
topology: v5e:2x2
jax: 0.10.0
libtpu: 0.0.40
codegen_flags: <defaults>
</compile_context>

<pallas_src>
import functools

import jax
import jax.numpy as jnp
from jax.experimental import pallas as pl
from jax.experimental.pallas import tpu as pltpu


def _round_up(n, m):
    return (n + m - 1) // m * m


def _min_sublane(dtype):
    # Minimum second-to-last block dim on TPU: 8 for 4-byte, 16 for 2-byte types.
    return {4: 8, 2: 16, 1: 32}.get(jnp.dtype(dtype).itemsize, 8)


def _vmem_capacity_bytes():
    try:
        return int(pltpu.get_tpu_info().vmem_capacity_bytes)
    except Exception:
        return 64 << 20  # conservative: v7x per-TensorCore VMEM


def _pick_batch_tile(B, sub, per_row_bytes, resident_bytes, max_batch_tile):
    """Batch tile: as large as the VMEM budget allows, >= 2 grid steps when
    B > 256 (v7x has 2 TensorCores), and either a multiple of the sublane tile
    or the full batch (both are legal block shapes)."""
    tile = B if B <= 256 else _round_up(pl.cdiv(B, 2), sub)
    tile = min(tile, max_batch_tile)
    budget = int(0.8 * _vmem_capacity_bytes()) - resident_bytes - (2 << 20)
    if per_row_bytes > 0:
        tile = min(tile, max(sub, budget // per_row_bytes))
    tile = min(tile, B)
    if tile < B:
        tile = min(B, max(sub, tile // sub * sub))
    return int(tile)


def _as_2d(a, B, O, name):
    """Normalize a tensor broadcastable to (B, O) to shape (1|B, 1|O) without
    materializing any lane/batch broadcast in HBM (broadcast happens in-kernel)."""
    a = jnp.asarray(a)
    if a.ndim == 0:
        a = a.reshape(1, 1)
    elif a.ndim == 1:
        a = a.reshape(1, a.shape[0])  # numpy/torch trailing-dim alignment
    if a.ndim != 2 or a.shape[1] not in (1, O) or a.shape[0] not in (1, B):
        raise ValueError(f"{name} with shape {a.shape} is not broadcastable to ({B}, {O})")
    return a


# ---------------------------------------------------------------------------
# Kernels
# ---------------------------------------------------------------------------
def _mlp_kernel(x_ref, w1_ref, b1_ref, w2_ref, b2_ref, o_ref):
    # fc1 on the MXU with f32 accumulation; bias + ReLU in f32 on the VPU.
    h = jnp.dot(x_ref[...], w1_ref[...], preferred_element_type=jnp.float32)
    h = jnp.maximum(h + b1_ref[...].astype(jnp.float32), 0.0)
    # fc2: cast h to the weight dtype so bf16 operands hit the bf16 MXU path;
    # accumulation stays f32.
    out = jnp.dot(h.astype(w2_ref.dtype), w2_ref[...],
                  preferred_element_type=jnp.float32)
    o_ref[...] = (out + b2_ref[...].astype(jnp.float32)).astype(o_ref.dtype)


def _td_kernel(tgt_ref, rew_ref, o_ref, *, gamma):
    # out + (reward + gamma*target - out) == reward + gamma*target: the MLP
    # output cancels exactly, so fc1/fc2 are dead work and skipped entirely.
    # Compute in f32 regardless of input/output dtype; broadcast the native
    # (1|tile, 1|O) operands in-register (no HBM materialization).
    val = (rew_ref[...].astype(jnp.float32)
           + gamma * tgt_ref[...].astype(jnp.float32))
    o_ref[...] = jnp.broadcast_to(val, o_ref.shape).astype(o_ref.dtype)


# ---------------------------------------------------------------------------
# Wrapper
# ---------------------------------------------------------------------------
def mgnn_with_td_forward(params, x, target=None, reward=None, *, gamma=0.99,
                         max_batch_tile=512, compute_dtype=jnp.bfloat16):
    """Pallas implementation of MGNNWithTD.forward.

    params: dict with w1 (Din,H), b1 (1,H), w2 (H,O), b2 (1,O)
    x: (B, Din); target/reward: None or broadcastable to (B, O)
    compute_dtype: matmul-operand dtype (default bf16; accumulation is f32).
    """
    w1, b1, w2, b2 = params["w1"], params["b1"], params["w2"], params["b2"]
    B, Din = x.shape
    H = w1.shape[1]
    O = w2.shape[1]
    out_dtype = x.dtype
    o_item = jnp.dtype(out_dtype).itemsize

    # ------------------ TD branch: matmul-free, mem-bound --------------------
    if target is not None and reward is not None:
        tgt = _as_2d(target, B, O, "target")
        rew = _as_2d(reward, B, O, "reward")
        sub = max(_min_sublane(out_dtype), _min_sublane(tgt.dtype),
                  _min_sublane(rew.dtype))
        per_row = 2 * O * o_item + O * 4 + sum(
            2 * a.shape[1] * a.dtype.itemsize for a in (tgt, rew) if a.shape[0] == B)
        tile = _pick_batch_tile(B, sub, per_row, 0, max_batch_tile)

        def in_spec(a):
            if a.shape[0] == B:
                return pl.BlockSpec((tile, a.shape[1]), lambda i: (i, 0))
            return pl.BlockSpec((1, a.shape[1]), lambda i: (0, 0))

        return pl.pallas_call(
            functools.partial(_td_kernel, gamma=float(gamma)),
            out_shape=jax.ShapeDtypeStruct((B, O), out_dtype),
            grid=(pl.cdiv(B, tile),),
            in_specs=[in_spec(tgt), in_spec(rew)],
            out_specs=pl.BlockSpec((tile, O), lambda i: (i, 0)),
            compiler_params=pltpu.CompilerParams(
                dimension_semantics=("parallel",)),
            cost_estimate=pl.CostEstimate(
                flops=2 * B * O, transcendentals=0,
                bytes_accessed=int(tgt.size * tgt.dtype.itemsize
                                   + rew.size * rew.dtype.itemsize
                                   + B * O * o_item)),
        )(tgt, rew)

    # ------------------ MLP branch: relu(x@W1 + b1)@W2 + b2 ------------------
    cdtype = (jnp.dtype(compute_dtype) if compute_dtype is not None
              else jnp.dtype(x.dtype))
    csize = cdtype.itemsize
    sub = max(_min_sublane(cdtype), _min_sublane(out_dtype))

    xc = x.astype(cdtype)
    w1c = w1.astype(cdtype)
    w2c = w2.astype(cdtype)
    b1c = b1.astype(jnp.float32).reshape(1, H)
    b2c = b2.astype(jnp.float32).reshape(1, O)

    # VMEM accounting (conservative: weights double-buffered; per-row includes
    # double-buffered x/out tiles, the f32 hidden tile, its cdtype cast copy
    # and the f32 pre-cast output tile).
    weight_bytes = (Din * H + H * O) * csize + (H + O) * 4
    per_row = 2 * Din * csize + 2 * O * o_item + H * (4 + csize) + O * 4
    tile = _pick_batch_tile(B, sub, per_row, 2 * weight_bytes, max_batch_tile)
    # TODO(synk): if the weights alone exceed the VMEM budget (huge H on v7x's
    # 64 MiB), add an inner reduction grid axis over H (W1 block (Din, tH),
    # W2 block (tH, O), f32 (tile, O) accumulator with pl.when init/finalize)
    # instead of shrinking the batch tile further.

    vmem_needed = 2 * weight_bytes + tile * per_row
    vmem_limit = int(min(max(vmem_needed + (2 << 20), 32 << 20),
                         int(0.9 * _vmem_capacity_bytes())))

    cost = pl.CostEstimate(
        flops=2 * B * (Din * H + H * O),
        transcendentals=0,
        bytes_accessed=int(B * Din * csize + weight_bytes + B * O * o_item))

    grid = (pl.cdiv(B, tile),)
    x_spec = pl.BlockSpec((tile, Din), lambda i: (i, 0))
    out_spec = pl.BlockSpec((tile, O), lambda i: (i, 0))

    def run(single_buffer_weights):
        def inv(shape):
            # Block-invariant operand: same block every grid step.
            if single_buffer_weights:
                return pl.BlockSpec(shape, lambda i: (0,) * len(shape),
                                    pipeline_mode=pl.Buffered(1))
            return pl.BlockSpec(shape, lambda i: (0,) * len(shape))

        return pl.pallas_call(
            _mlp_kernel,
            out_shape=jax.ShapeDtypeStruct((B, O), out_dtype),
            grid=grid,
            in_specs=[x_spec, inv((Din, H)), inv((1, H)), inv((H, O)), inv((1, O))],
            out_specs=out_spec,
            compiler_params=pltpu.CompilerParams(
                dimension_semantics=("parallel",),
                vmem_limit_bytes=vmem_limit),
            cost_estimate=cost,
        )(xc, w1c, b1c, w2c, b2c)

    try:
        # Single-buffer the block-invariant weights/biases (halves their VMEM
        # footprint; they are reused unchanged by every grid step).
        return run(True)
    except Exception:
        # pipeline_mode=pl.Buffered(1) not supported by this jax build.
        return run(False)


# ---------------------------------------------------------------------------
# Init + pure-JAX reference
# ---------------------------------------------------------------------------
def init_params(key, input_dim, hidden_dim, output_dim, dtype=jnp.float32):
    """Deterministic init mimicking nn.Linear (uniform +-1/sqrt(fan_in))."""
    k1, k2, k3, k4 = jax.random.split(key, 4)
    bound1 = 1.0 / jnp.sqrt(input_dim)
    bound2 = 1.0 / jnp.sqrt(hidden_dim)
    return {
        "w1": jax.random.uniform(k1, (input_dim, hidden_dim), dtype, -bound1, bound1),
        "b1": jax.random.uniform(k2, (1, hidden_dim), dtype, -bound1, bound1),
        "w2": jax.random.uniform(k3, (hidden_dim, output_dim), dtype, -bound2, bound2),
        "b2": jax.random.uniform(k4, (1, output_dim), dtype, -bound2, bound2),
    }


def _reference_forward(params, x, target=None, reward=None, gamma=0.99):
    h = jnp.maximum(x @ params["w1"] + params["b1"], 0.0)
    out = h @ params["w2"] + params["b2"]
    if target is not None and reward is not None:
        td_error = reward + gamma * target - out
        out = out + td_error
    return out


if __name__ == "__main__":
    key = jax.random.PRNGKey(0)
    kp, kx, kt, kr, kb = jax.random.split(key, 5)

    batch, input_dim, hidden_dim, output_dim = 8, 32, 64, 16
    gamma = 0.99

    params = init_params(kp, input_dim, hidden_dim, output_dim)
    x = jax.random.normal(kx, (batch, input_dim), jnp.float32)
    target = jax.random.normal(kt, (batch, output_dim), jnp.float32)
    reward = (jax.random.uniform(kr, (batch, 1)) > 0.5).astype(jnp.float32)

    ref_plain = _reference_forward(params, x)
    ref_td = _reference_forward(params, x, target, reward, gamma)

    # Plain forward, default bf16 MXU operands (f32 accumulation).
    out_plain = jax.block_until_ready(mgnn_with_td_forward(params, x, gamma=gamma))
    assert jnp.allclose(out_plain, ref_plain, atol=2e-2, rtol=2e-2), "bf16 fwd mismatch"

    # Plain forward, f32 operands (tight tolerance).
    out_f32 = jax.block_until_ready(
        mgnn_with_td_forward(params, x, gamma=gamma, compute_dtype=jnp.float32))
    assert jnp.allclose(out_f32, ref_plain, atol=1e-5, rtol=1e-5), "f32 fwd mismatch"

    # TD forward: reward stays at its native (B, 1) shape, broadcast in-kernel.
    out_td = jax.block_until_ready(
        mgnn_with_td_forward(params, x, target, reward, gamma=gamma))
    assert jnp.allclose(out_td, ref_td, atol=1e-5, rtol=1e-5), "TD fwd mismatch"

    # Larger batch: exercises the multi-step grid (tile=512, grid=(2,)) so both
    # v7x TensorCores get work under dimension_semantics=("parallel",).
    big_batch = 1024
    xb = jax.random.normal(kb, (big_batch, input_dim), jnp.float32)
    out_big = jax.block_until_ready(mgnn_with_td_forward(params, xb, gamma=gamma))
    ref_big = _reference_forward(params, xb)
    assert jnp.allclose(out_big, ref_big, atol=2e-2, rtol=2e-2), "big-batch mismatch"

    print("KERNEL_OK")
</pallas_src>

<mosaic_0001>
module attributes {stable_mosaic.version = 11 : i64} {
  func.func @_mlp_kernel(%arg0: i32, %arg1: memref<8x32xbf16, #tpu.memory_space<vmem>>, %arg2: memref<32x64xbf16, #tpu.memory_space<vmem>>, %arg3: memref<1x64xf32, #tpu.memory_space<vmem>>, %arg4: memref<64x16xbf16, #tpu.memory_space<vmem>>, %arg5: memref<1x16xf32, #tpu.memory_space<vmem>>, %arg6: memref<8x16xf32, #tpu.memory_space<vmem>>) attributes {dimension_semantics = [#tpu.dimension_semantics<parallel>], iteration_bounds = array<i64: 1>, scalar_prefetch = 0 : i64, scratch_operands = 0 : i64, tpu.core_type = #tpu.core_type<tc>, window_params = [{transform_indices = @transform_0, window_bounds = array<i64: 8, 32>}, {pipeline_mode = #tpu.pipeline_mode<synchronous>, transform_indices = @transform_1, window_bounds = array<i64: 32, 64>}, {pipeline_mode = #tpu.pipeline_mode<synchronous>, transform_indices = @transform_2, window_bounds = array<i64: 1, 64>}, {pipeline_mode = #tpu.pipeline_mode<synchronous>, transform_indices = @transform_3, window_bounds = array<i64: 64, 16>}, {pipeline_mode = #tpu.pipeline_mode<synchronous>, transform_indices = @transform_4, window_bounds = array<i64: 1, 16>}, {transform_indices = @transform_5, window_bounds = array<i64: 8, 16>}]} {
    %c0 = arith.constant 0 : index
    %c0_0 = arith.constant 0 : index
    %0 = vector.load %arg1[%c0, %c0_0] : memref<8x32xbf16, #tpu.memory_space<vmem>>, vector<8x32xbf16>
    %c0_1 = arith.constant 0 : index
    %c0_2 = arith.constant 0 : index
    %1 = vector.load %arg2[%c0_1, %c0_2] : memref<32x64xbf16, #tpu.memory_space<vmem>>, vector<32x64xbf16>
    %cst = arith.constant dense<0.000000e+00> : vector<8x64xf32>
    %2 = tpu.matmul %0, %1, %cst {dimension_numbers = #tpu.dot_dimension_numbers<[1], [0], [0], [1], [0, 0, 1, 1], [], []>} : vector<8x32xbf16>, vector<32x64xbf16>, vector<8x64xf32> -> vector<8x64xf32>
    %c0_3 = arith.constant 0 : index
    %c0_4 = arith.constant 0 : index
    %3 = vector.load %arg3[%c0_3, %c0_4] : memref<1x64xf32, #tpu.memory_space<vmem>>, vector<1x64xf32>
    %4 = vector.broadcast %3 : vector<1x64xf32> to vector<8x64xf32>
    %5 = arith.addf %2, %4 : vector<8x64xf32>
    %cst_5 = arith.constant 0.000000e+00 : f32
    %6 = vector.broadcast %cst_5 : f32 to vector<8x64xf32>
    %7 = arith.maximumf %5, %6 : vector<8x64xf32>
    %8 = arith.truncf %7 : vector<8x64xf32> to vector<8x64xbf16>
    %c0_6 = arith.constant 0 : index
    %c0_7 = arith.constant 0 : index
    %9 = vector.load %arg4[%c0_6, %c0_7] : memref<64x16xbf16, #tpu.memory_space<vmem>>, vector<64x16xbf16>
    %cst_8 = arith.constant dense<0.000000e+00> : vector<8x16xf32>
    %10 = tpu.matmul %8, %9, %cst_8 {dimension_numbers = #tpu.dot_dimension_numbers<[1], [0], [0], [1], [0, 0, 1, 1], [], []>} : vector<8x64xbf16>, vector<64x16xbf16>, vector<8x16xf32> -> vector<8x16xf32>
    %c0_9 = arith.constant 0 : index
    %c0_10 = arith.constant 0 : index
    %11 = vector.load %arg5[%c0_9, %c0_10] : memref<1x16xf32, #tpu.memory_space<vmem>>, vector<1x16xf32>
    %12 = vector.broadcast %11 : vector<1x16xf32> to vector<8x16xf32>
    %13 = arith.addf %10, %12 : vector<8x16xf32>
    %c0_11 = arith.constant 0 : index
    %c0_12 = arith.constant 0 : index
    %14 = vector.load %arg6[%c0_11, %c0_12] : memref<8x16xf32, #tpu.memory_space<vmem>>, vector<8x16xf32>
    tpu.vector_store %arg6[%c0_11, %c0_12], %13 {strides = array<i32>} : memref<8x16xf32, #tpu.memory_space<vmem>>, vector<8x16xf32>,
    return
  }
  func.func @transform_0(%arg0: i32) -> (i32, i32) {
    %c0_i32 = arith.constant 0 : i32
    %c0_i32_0 = arith.constant 0 : i32
    return %arg0, %c0_i32 : i32, i32
  }
  func.func @transform_1(%arg0: i32) -> (i32, i32) {
    %c0_i32 = arith.constant 0 : i32
    %c0_i32_0 = arith.constant 0 : i32
    %c0_i32_1 = arith.constant 0 : i32
    return %c0_i32, %c0_i32_0 : i32, i32
  }
  func.func @transform_2(%arg0: i32) -> (i32, i32) {
    %c0_i32 = arith.constant 0 : i32
    %c0_i32_0 = arith.constant 0 : i32
    %c0_i32_1 = arith.constant 0 : i32
    return %c0_i32, %c0_i32_0 : i32, i32
  }
  func.func @transform_3(%arg0: i32) -> (i32, i32) {
    %c0_i32 = arith.constant 0 : i32
    %c0_i32_0 = arith.constant 0 : i32
    %c0_i32_1 = arith.constant 0 : i32
    return %c0_i32, %c0_i32_0 : i32, i32
  }
  func.func @transform_4(%arg0: i32) -> (i32, i32) {
    %c0_i32 = arith.constant 0 : i32
    %c0_i32_0 = arith.constant 0 : i32
    %c0_i32_1 = arith.constant 0 : i32
    return %c0_i32, %c0_i32_0 : i32, i32
  }
  func.func @transform_5(%arg0: i32) -> (i32, i32) {
    %c0_i32 = arith.constant 0 : i32
    %c0_i32_0 = arith.constant 0 : i32
    return %arg0, %c0_i32 : i32, i32
  }
}

module attributes {stable_mosaic.version = 11 : i64} {
  func.func @_mlp_kernel(%arg0: i32, %arg1: memref<8x32xbf16, #tpu.memory_space<vmem>>, %arg2: memref<32x64xbf16, #tpu.memory_space<vmem>>, %arg3: memref<1x64xf32, #tpu.memory_space<vmem>>, %arg4: memref<64x16xbf16, #tpu.memory_space<vmem>>, %arg5: memref<1x16xf32, #tpu.memory_space<vmem>>, %arg6: memref<8x16xf32, #tpu.memory_space<vmem>>) attributes {dimension_semantics = [#tpu.dimension_semantics<parallel>], iteration_bounds = array<i64: 1>, scalar_prefetch = 0 : i64, scratch_operands = 0 : i64, tpu.core_type = #tpu.core_type<tc>, window_params = [{transform_indices = @transform_0, window_bounds = array<i64: 8, 32>}, {pipeline_mode = #tpu.pipeline_mode<synchronous>, transform_indices = @transform_1, window_bounds = array<i64: 32, 64>}, {pipeline_mode = #tpu.pipeline_mode<synchronous>, transform_indices = @transform_2, window_bounds = array<i64: 1, 64>}, {pipeline_mode = #tpu.pipeline_mode<synchronous>, transform_indices = @transform_3, window_bounds = array<i64: 64, 16>}, {pipeline_mode = #tpu.pipeline_mode<synchronous>, transform_indices = @transform_4, window_bounds = array<i64: 1, 16>}, {transform_indices = @transform_5, window_bounds = array<i64: 8, 16>}]} {
    %c0 = arith.constant 0 : index
    %c0_0 = arith.constant 0 : index
    %0 = vector.load %arg1[%c0, %c0_0] : memref<8x32xbf16, #tpu.memory_space<vmem>>, vector<8x32xbf16>
    %c0_1 = arith.constant 0 : index
    %c0_2 = arith.constant 0 : index
    %1 = vector.load %arg2[%c0_1, %c0_2] : memref<32x64xbf16, #tpu.memory_space<vmem>>, vector<32x64xbf16>
    %cst = arith.constant dense<0.000000e+00> : vector<8x64xf32>
    %2 = tpu.matmul %0, %1, %cst {dimension_numbers = #tpu.dot_dimension_numbers<[1], [0], [0], [1], [0, 0, 1, 1], [], []>} : vector<8x32xbf16>, vector<32x64xbf16>, vector<8x64xf32> -> vector<8x64xf32>
    %c0_3 = arith.constant 0 : index
    %c0_4 = arith.constant 0 : index
    %3 = vector.load %arg3[%c0_3, %c0_4] : memref<1x64xf32, #tpu.memory_space<vmem>>, vector<1x64xf32>
    %4 = vector.broadcast %3 : vector<1x64xf32> to vector<8x64xf32>
    %5 = arith.addf %2, %4 : vector<8x64xf32>
    %cst_5 = arith.constant 0.000000e+00 : f32
    %6 = vector.broadcast %cst_5 : f32 to vector<8x64xf32>
    %7 = arith.maximumf %5, %6 : vector<8x64xf32>
    %8 = arith.truncf %7 : vector<8x64xf32> to vector<8x64xbf16>
    %c0_6 = arith.constant 0 : index
    %c0_7 = arith.constant 0 : index
    %9 = vector.load %arg4[%c0_6, %c0_7] : memref<64x16xbf16, #tpu.memory_space<vmem>>, vector<64x16xbf16>
    %cst_8 = arith.constant dense<0.000000e+00> : vector<8x16xf32>
    %10 = tpu.matmul %8, %9, %cst_8 {dimension_numbers = #tpu.dot_dimension_numbers<[1], [0], [0], [1], [0, 0, 1, 1], [], []>} : vector<8x64xbf16>, vector<64x16xbf16>, vector<8x16xf32> -> vector<8x16xf32>
    %c0_9 = arith.constant 0 : index
    %c0_10 = arith.constant 0 : index
    %11 = vector.load %arg5[%c0_9, %c0_10] : memref<1x16xf32, #tpu.memory_space<vmem>>, vector<1x16xf32>
    %12 = vector.broadcast %11 : vector<1x16xf32> to vector<8x16xf32>
    %13 = arith.addf %10, %12 : vector<8x16xf32>
    %c0_11 = arith.constant 0 : index
    %c0_12 = arith.constant 0 : index
    %14 = vector.load %arg6[%c0_11, %c0_12] : memref<8x16xf32, #tpu.memory_space<vmem>>, vector<8x16xf32>
    tpu.vector_store %arg6[%c0_11, %c0_12], %13 {strides = array<i32>} : memref<8x16xf32, #tpu.memory_space<vmem>>, vector<8x16xf32>,
    return
  }
  func.func @transform_0(%arg0: i32) -> (i32, i32) {
    %c0_i32 = arith.constant 0 : i32
    %c0_i32_0 = arith.constant 0 : i32
    return %arg0, %c0_i32 : i32, i32
  }
  func.func @transform_1(%arg0: i32) -> (i32, i32) {
    %c0_i32 = arith.constant 0 : i32
    %c0_i32_0 = arith.constant 0 : i32
    %c0_i32_1 = arith.constant 0 : i32
    return %c0_i32, %c0_i32_0 : i32, i32
  }
  func.func @transform_2(%arg0: i32) -> (i32, i32) {
    %c0_i32 = arith.constant 0 : i32
    %c0_i32_0 = arith.constant 0 : i32
    %c0_i32_1 = arith.constant 0 : i32
    return %c0_i32, %c0_i32_0 : i32, i32
  }
  func.func @transform_3(%arg0: i32) -> (i32, i32) {
    %c0_i32 = arith.constant 0 : i32
    %c0_i32_0 = arith.constant 0 : i32
    %c0_i32_1 = arith.constant 0 : i32
    return %c0_i32, %c0_i32_0 : i32, i32
  }
  func.func @transform_4(%arg0: i32) -> (i32, i32) {
    %c0_i32 = arith.constant 0 : i32
    %c0_i32_0 = arith.constant 0 : i32
    %c0_i32_1 = arith.constant 0 : i32
    return %c0_i32, %c0_i32_0 : i32, i32
  }
  func.func @transform_5(%arg0: i32) -> (i32, i32) {
    %c0_i32 = arith.constant 0 : i32
    %c0_i32_0 = arith.constant 0 : i32
    return %arg0, %c0_i32 : i32, i32
  }
}

</mosaic_0001>

<llo_original>
// kernel: tpu_custom_call.1
$region0: #{tpu_custom_call.1}
  #allocation0 [shape = 'u32[]', space=smem, size = 0x4, offset = 0x4, fixed_abs, tag = 'smem constant byte address 0x4 - core index']
  #allocation1 [shape = 'u32[72,128]{1,0:T(1,128)}', space=vmem, size = 0x9000, scoped, tag = 'internal scratch']
  %s0 = inlined_call_operand.vmem [shape: bf16[8,32], index: 0, kind: input, shape index: {}]
  %s1 = inlined_call_operand.vmem [shape: bf16[32,64], index: 1, kind: input, shape index: {}]
  %s2 = inlined_call_operand.vmem [shape: f32[1,64], index: 2, kind: input, shape index: {}]
  %s3 = inlined_call_operand.vmem [shape: bf16[64,16], index: 3, kind: input, shape index: {}]
  %s4 = inlined_call_operand.vmem [shape: f32[1,16], index: 4, kind: input, shape index: {}]
  %s5 = inlined_call_operand.hbm [shape: f32[8,16], index: 5, kind: output, shape index: {}]
  %s6 = sld [smem:[#allocation0]]
  $region30: #{tpu_custom_call.1} parent=0
    _
  %s8 = ssub.s32 1, %s6
  %s9 = scalar_select 0, %s8, %s6
  $region1: #{tpu_custom_call.1} parent=0
    #allocation2 [shape = 'u8[4096]{0}', space=vmem, size = 0x1000, scoped, tag = 'output window, operand 0, single buffered']
    #allocation3 [shape = 's32[1]{0}', space=sflag, size = 0x4, scoped, tag = 'scoped memory for tpu_custom_call.1']
    %10 = vsyncpa [#allocation3], 0
    // Predicated region
    $region2: #{tpu_custom_call.1} parent=1 // pred_check
      _
    $region3: #{tpu_custom_call.1} parent=1 // pred_check_branch
      %12 = sbr.rel (0) target = $region5
    $region4: #{tpu_custom_call.1} parent=1 // pred_region
      _
    $region5: #{tpu_custom_call.1} parent=1 // pred_fallthru
      _
    // Predicated region
    $region6: #{tpu_custom_call.1} parent=1 // pred_check
      _
    $region7: #{tpu_custom_call.1} parent=1 // pred_check_branch
      %14 = sbr.rel (0) target = $region9
    $region8: #{tpu_custom_call.1} parent=1 // pred_region
      _
    $region9: #{tpu_custom_call.1} parent=1 // pred_fallthru
      _
    // Predicated region
    $region10: #{tpu_custom_call.1} parent=1 // pred_check
      _
    $region11: #{tpu_custom_call.1} parent=1 // pred_check_branch
      %16 = sbr.rel (0) target = $region13
    $region12: #{tpu_custom_call.1} parent=1 // pred_region
      _
    $region13: #{tpu_custom_call.1} parent=1 // pred_fallthru
      _
    // Predicated region
    $region14: #{tpu_custom_call.1} parent=1 // pred_check
      _
    $region15: #{tpu_custom_call.1} parent=1 // pred_check_branch
      %18 = sbr.rel (0) target = $region17
    $region16: #{tpu_custom_call.1} parent=1 // pred_region
      _
    $region17: #{tpu_custom_call.1} parent=1 // pred_fallthru
      _
    // Predicated region
    $region18: #{tpu_custom_call.1} parent=1 // pred_check
      _
    $region19: #{tpu_custom_call.1} parent=1 // pred_check_branch
      %20 = sbr.rel (0) target = $region21
    $region20: #{tpu_custom_call.1} parent=1 // pred_region
      _
    $region21: #{tpu_custom_call.1} parent=1 // pred_fallthru
      _
    %v22 = vld [vmem:[%s0] sm:$0xf]
    %v23 = vld [vmem:[%s1] sm:$0xf]
    %v24 = vld [vmem:[%s1 + $0x4] sm:$0xf]
    %v25 = vld [vmem:[%s1 + $0x8] sm:$0xf]
    %v26 = vld [vmem:[%s1 + $0xc] sm:$0xf]
    %v27 = vld [vmem:[%s2] sm:$0x1]
    %v29 = vperm.slane %v27, 0
    %v35 = vunpack.c.l.b16 %v23
    %v36 = vunpack.c.l.b16 %v24
    %v37 = vunpack.c.l.b16 %v25
    %v38 = vunpack.c.l.b16 %v26
    %v39 = vpack.c.b16 %v36, %v35
    %v40 = vpack.c.b16 %v38, %v37
    %vm43 = vcmask 261120
    %v45 = vsel %vm43, %v22, 0
    %47 = vmatpush.bf16.msra.mxu0 0
    %48 = vmatpush.bf16.msra.mxu0 0
    %49 = vmatpush.bf16.msra.mxu0 0
    %50 = vmatpush.bf16.msra.mxu0 0
    %51 = vmatpush.bf16.msra.mxu0 0
    %52 = vmatpush.bf16.msra.mxu0 0
    %53 = vmatpush.bf16.msra.mxu0 %v40
    %54 = vmatpush.bf16.msra.mxu0 %v39
    %55 = vmatmul.bf16.gmra.mxu0 %v45
    %v56 = vpop.f32.mrf.mxu0
    %v57 = vadd.f32 %v29, %v56
    %v58 = vpop.f32.mrf.mxu0
    %59 = vdwg.mxu0
    %v60 = vmax.f32 %v57, 0.0
    %v61 = vpack.c.bf16 %v60, %v60
    %v62 = vld [vmem:[%s3] sm:$0xf]
    %v63 = vld [vmem:[%s3 + $0x4] sm:$0xf]
    %v64 = vld [vmem:[%s3 + $0x8] sm:$0xf]
    %v65 = vld [vmem:[%s3 + $0xc] sm:$0xf]
    %v66 = vld [vmem:[%s3 + $0x10] sm:$0xf]
    %v67 = vld [vmem:[%s3 + $0x14] sm:$0xf]
    %v68 = vld [vmem:[%s3 + $0x18] sm:$0xf]
    %v69 = vld [vmem:[%s3 + $0x1c] sm:$0xf]
    %v70 = vld [vmem:[%s4] sm:$0x1]
    %v72 = vperm.slane %v70, 0
    %v82 = vunpack.c.l.b16 %v62
    %v83 = vunpack.c.l.b16 %v63
    %v84 = vunpack.c.l.b16 %v64
    %v85 = vunpack.c.l.b16 %v65
    %v86 = vunpack.c.l.b16 %v66
    %v87 = vunpack.c.l.b16 %v67
    %v88 = vunpack.c.l.b16 %v68
    %v89 = vunpack.c.l.b16 %v69
    %v90 = vpack.c.b16 %v83, %v82
    %v91 = vpack.c.b16 %v85, %v84
    %v92 = vpack.c.b16 %v87, %v86
    %v93 = vpack.c.b16 %v89, %v88
    %vm98 = vcmask 523264
    %v100 = vsel %vm98, %v61, 0
    %102 = vmatpush.bf16.msra.mxu0 0
    %103 = vmatpush.bf16.msra.mxu0 0
    %104 = vmatpush.bf16.msra.mxu0 0
    %105 = vmatpush.bf16.msra.mxu0 0
    %106 = vmatpush.bf16.msra.mxu0 %v93
    %107 = vmatpush.bf16.msra.mxu0 %v92
    %108 = vmatpush.bf16.msra.mxu0 %v91
    %109 = vmatpush.bf16.msra.mxu0 %v90
    %110 = vmatmul.bf16.gmra.mxu0 %v100
    %v111 = vpop.f32.mrf.mxu0
    %v112 = vadd.f32 %v72, %v111
    %v113 = vpop.f32.mrf.mxu0
    %114 = vdwg.mxu0
    %vm115 = vcmask 130048
    %116 = vst.msk [vmem:[#allocation2] sm:$0xff] %vm115, %v112
    // Predicated region
    $region22: #{tpu_custom_call.1} parent=1 // pred_check
      _
    $region23: #{tpu_custom_call.1} parent=1 // pred_check_branch
      %118 = sbr.rel (0) target = $region25
    $region24: #{tpu_custom_call.1} parent=1 // pred_region
      %120 = vsyncadd [#allocation3], 0
      %s122 = sshll.u32 [#allocation2], 4
      %s123 = int_to_ptr.vmem [resolvable:$true] %s122
      %s124 = sshll.u32 %s5, 4
      %s125 = int_to_ptr.hbm [resolvable:$true] %s124
      %127 = dma.vmem_to_hbm [thread:$0]  %s123, 128, %s125, [#allocation3]
    $region25: #{tpu_custom_call.1} parent=1 // pred_fallthru
      _
    // Predicated region
    $region26: #{tpu_custom_call.1} parent=1 // pred_check
      _
    $region27: #{tpu_custom_call.1} parent=1 // pred_check_branch
      %129 = sbr.rel (0) target = $region29
    $region28: #{tpu_custom_call.1} parent=1 // pred_region
      %131 = dma.done [#allocation3], 128
    $region29: #{tpu_custom_call.1} parent=1 // pred_fallthru
      _
    %132 = vsyncpa [#allocation3], 1

// kernel: tpu_custom_call.1
$region0: #{tpu_custom_call.1}
  #allocation0 [shape = 'u32[]', space=smem, size = 0x4, offset = 0x4, fixed_abs, tag = 'smem constant byte address 0x4 - core index']
  #allocation1 [shape = 'u32[72,128]{1,0:T(1,128)}', space=vmem, size = 0x9000, scoped, tag = 'internal scratch']
  %s0 = inlined_call_operand.vmem [shape: bf16[8,32], index: 0, kind: input, shape index: {}]
  %s1 = inlined_call_operand.vmem [shape: bf16[32,64], index: 1, kind: input, shape index: {}]
  %s2 = inlined_call_operand.vmem [shape: f32[1,64], index: 2, kind: input, shape index: {}]
  %s3 = inlined_call_operand.vmem [shape: bf16[64,16], index: 3, kind: input, shape index: {}]
  %s4 = inlined_call_operand.vmem [shape: f32[1,16], index: 4, kind: input, shape index: {}]
  %s5 = inlined_call_operand.hbm [shape: f32[8,16], index: 5, kind: output, shape index: {}]
  %s6 = sld [smem:[#allocation0]]
  $region30: #{tpu_custom_call.1} parent=0
    _
  %s8 = ssub.s32 1, %s6
  %s9 = scalar_select 0, %s8, %s6
  $region1: #{tpu_custom_call.1} parent=0
    #allocation2 [shape = 'u8[4096]{0}', space=vmem, size = 0x1000, scoped, tag = 'output window, operand 0, single buffered']
    #allocation3 [shape = 's32[1]{0}', space=sflag, size = 0x4, scoped, tag = 'scoped memory for tpu_custom_call.1']
    %10 = vsyncpa [#allocation3], 0
    // Predicated region
    $region2: #{tpu_custom_call.1} parent=1 // pred_check
      _
    $region3: #{tpu_custom_call.1} parent=1 // pred_check_branch
      %12 = sbr.rel (0) target = $region5
    $region4: #{tpu_custom_call.1} parent=1 // pred_region
      _
    $region5: #{tpu_custom_call.1} parent=1 // pred_fallthru
      _
    // Predicated region
    $region6: #{tpu_custom_call.1} parent=1 // pred_check
      _
    $region7: #{tpu_custom_call.1} parent=1 // pred_check_branch
      %14 = sbr.rel (0) target = $region9
    $region8: #{tpu_custom_call.1} parent=1 // pred_region
      _
    $region9: #{tpu_custom_call.1} parent=1 // pred_fallthru
      _
    // Predicated region
    $region10: #{tpu_custom_call.1} parent=1 // pred_check
      _
    $region11: #{tpu_custom_call.1} parent=1 // pred_check_branch
      %16 = sbr.rel (0) target = $region13
    $region12: #{tpu_custom_call.1} parent=1 // pred_region
      _
    $region13: #{tpu_custom_call.1} parent=1 // pred_fallthru
      _
    // Predicated region
    $region14: #{tpu_custom_call.1} parent=1 // pred_check
      _
    $region15: #{tpu_custom_call.1} parent=1 // pred_check_branch
      %18 = sbr.rel (0) target = $region17
    $region16: #{tpu_custom_call.1} parent=1 // pred_region
      _
    $region17: #{tpu_custom_call.1} parent=1 // pred_fallthru
      _
    // Predicated region
    $region18: #{tpu_custom_call.1} parent=1 // pred_check
      _
    $region19: #{tpu_custom_call.1} parent=1 // pred_check_branch
      %20 = sbr.rel (0) target = $region21
    $region20: #{tpu_custom_call.1} parent=1 // pred_region
      _
    $region21: #{tpu_custom_call.1} parent=1 // pred_fallthru
      _
    %v22 = vld [vmem:[%s0] sm:$0xf]
    %v23 = vld [vmem:[%s1] sm:$0xf]
    %v24 = vld [vmem:[%s1 + $0x4] sm:$0xf]
    %v25 = vld [vmem:[%s1 + $0x8] sm:$0xf]
    %v26 = vld [vmem:[%s1 + $0xc] sm:$0xf]
    %v27 = vld [vmem:[%s2] sm:$0x1]
    %v29 = vperm.slane %v27, 0
    %v35 = vunpack.c.l.b16 %v23
    %v36 = vunpack.c.l.b16 %v24
    %v37 = vunpack.c.l.b16 %v25
    %v38 = vunpack.c.l.b16 %v26
    %v39 = vpack.c.b16 %v36, %v35
    %v40 = vpack.c.b16 %v38, %v37
    %vm43 = vcmask 261120
    %v45 = vsel %vm43, %v22, 0
    %47 = vmatpush.bf16.msra.mxu0 0
    %48 = vmatpush.bf16.msra.mxu0 0
    %49 = vmatpush.bf16.msra.mxu0 0
    %50 = vmatpush.bf16.msra.mxu0 0
    %51 = vmatpush.bf16.msra.mxu0 0
    %52 = vmatpush.bf16.msra.mxu0 0
    %53 = vmatpush.bf16.msra.mxu0 %v40
    %54 = vmatpush.bf16.msra.mxu0 %v39
    %55 = vmatmul.bf16.gmra.mxu0 %v45
    %v56 = vpop.f32.mrf.mxu0
    %v57 = vadd.f32 %v29, %v56
    %v58 = vpop.f32.mrf.mxu0
    %59 = vdwg.mxu0
    %v60 = vmax.f32 %v57, 0.0
    %v61 = vpack.c.bf16 %v60, %v60
    %v62 = vld [vmem:[%s3] sm:$0xf]
    %v63 = vld [vmem:[%s3 + $0x4] sm:$0xf]
    %v64 = vld [vmem:[%s3 + $0x8] sm:$0xf]
    %v65 = vld [vmem:[%s3 + $0xc] sm:$0xf]
    %v66 = vld [vmem:[%s3 + $0x10] sm:$0xf]
    %v67 = vld [vmem:[%s3 + $0x14] sm:$0xf]
    %v68 = vld [vmem:[%s3 + $0x18] sm:$0xf]
    %v69 = vld [vmem:[%s3 + $0x1c] sm:$0xf]
    %v70 = vld [vmem:[%s4] sm:$0x1]
    %v72 = vperm.slane %v70, 0
    %v82 = vunpack.c.l.b16 %v62
    %v83 = vunpack.c.l.b16 %v63
    %v84 = vunpack.c.l.b16 %v64
    %v85 = vunpack.c.l.b16 %v65
    %v86 = vunpack.c.l.b16 %v66
    %v87 = vunpack.c.l.b16 %v67
    %v88 = vunpack.c.l.b16 %v68
    %v89 = vunpack.c.l.b16 %v69
    %v90 = vpack.c.b16 %v83, %v82
    %v91 = vpack.c.b16 %v85, %v84
    %v92 = vpack.c.b16 %v87, %v86
    %v93 = vpack.c.b16 %v89, %v88
    %vm98 = vcmask 523264
    %v100 = vsel %vm98, %v61, 0
    %102 = vmatpush.bf16.msra.mxu0 0
    %103 = vmatpush.bf16.msra.mxu0 0
    %104 = vmatpush.bf16.msra.mxu0 0
    %105 = vmatpush.bf16.msra.mxu0 0
    %106 = vmatpush.bf16.msra.mxu0 %v93
    %107 = vmatpush.bf16.msra.mxu0 %v92
    %108 = vmatpush.bf16.msra.mxu0 %v91
    %109 = vmatpush.bf16.msra.mxu0 %v90
    %110 = vmatmul.bf16.gmra.mxu0 %v100
    %v111 = vpop.f32.mrf.mxu0
    %v112 = vadd.f32 %v72, %v111
    %v113 = vpop.f32.mrf.mxu0
    %114 = vdwg.mxu0
    %vm115 = vcmask 130048
    %116 = vst.msk [vmem:[#allocation2] sm:$0xff] %vm115, %v112
    // Predicated region
    $region22: #{tpu_custom_call.1} parent=1 // pred_check
      _
    $region23: #{tpu_custom_call.1} parent=1 // pred_check_branch
      %118 = sbr.rel (0) target = $region25
    $region24: #{tpu_custom_call.1} parent=1 // pred_region
      %120 = vsyncadd [#allocation3], 0
      %s122 = sshll.u32 [#allocation2], 4
      %s123 = int_to_ptr.vmem [resolvable:$true] %s122
      %s124 = sshll.u32 %s5, 4
      %s125 = int_to_ptr.hbm [resolvable:$true] %s124
      %127 = dma.vmem_to_hbm [thread:$0]  %s123, 128, %s125, [#allocation3]
    $region25: #{tpu_custom_call.1} parent=1 // pred_fallthru
      _
    // Predicated region
    $region26: #{tpu_custom_call.1} parent=1 // pred_check
      _
    $region27: #{tpu_custom_call.1} parent=1 // pred_check_branch
      %129 = sbr.rel (0) target = $region29
    $region28: #{tpu_custom_call.1} parent=1 // pred_region
      %131 = dma.done [#allocation3], 128
    $region29: #{tpu_custom_call.1} parent=1 // pred_fallthru
      _
    %132 = vsyncpa [#allocation3], 1

</llo_original>
